<compile_context>
chip_gen: v7x
topology: tpu7x:2x2x1
jax: 0.10.0
libtpu: 0.0.40
codegen_flags: <defaults>
</compile_context>

<pallas_src>
import functools

import jax
import jax.numpy as jnp
from jax.experimental import pallas as pl
from jax.experimental.pallas import tpu as pltpu

MARGIN = 2.0
EPS = 1e-6  # torch F.pairwise_distance default eps


def _contrastive_kernel(x1_ref, x2_ref, label_ref, out_ref, sq_acc,
                        *, feat, tile_d, mask_cols):
    # x1_ref, x2_ref: (tb, td) tiles; label_ref/out_ref: (tb, 1);
    # sq_acc: (tb, 1) f32 scratch accumulating the squared distance over D.
    j = pl.program_id(1)

    @pl.when(j == 0)
    def _init():
        sq_acc[...] = jnp.zeros_like(sq_acc)

    x1 = x1_ref[...].astype(jnp.float32)
    x2 = x2_ref[...].astype(jnp.float32)
    diff = (x1 - x2) + EPS                      # torch adds eps to the diff
    if mask_cols:                               # trace-time: only if D % td != 0
        col = jax.lax.broadcasted_iota(jnp.int32, diff.shape, 1) + j * tile_d
        diff = jnp.where(col < feat, diff, 0.0)
    sq_acc[...] += jnp.sum(diff * diff, axis=-1, keepdims=True)

    @pl.when(j == pl.num_programs(1) - 1)
    def _finish():
        lab = label_ref[...].astype(jnp.float32)
        d = jnp.sqrt(sq_acc[...])               # euclidean distance, keepdim
        d2 = d * d                              # torch parity: pow(sqrt(x), 2)
        hinge = jnp.maximum(MARGIN - d, 0.0)
        out_ref[...] = (1.0 - lab) * d2 + lab * (hinge * hinge)


def _plan_tiles(batch, feat, in_itemsize, label_itemsize,
                budget_bytes=40 * 1024 * 1024,
                target_rows=512, max_rows=4096):
    """Pick (tile_b, tile_d, vmem_limit_bytes) with full VMEM accounting.

    Per tile row the working set is approximately:
      * 2 inputs x 2 pipeline buffers in the native dtype : 4 * td * itemsize
      * ~3 f32 tile-sized temporaries (x1f/x2f/diff)      : 12 * td
      * lane-padded (tb,1) buffers: label x2, out x2,
        sq-dist scratch x1                                : 128 * (2*lab + 12)
    """
    def row_bytes(td):
        return 4 * td * in_itemsize + 12 * td + 128 * (2 * label_itemsize + 12)

    target_rows = max(8, min(target_rows, batch))

    td = feat
    if feat > 256 and row_bytes(feat) * target_rows > budget_bytes:
        # Split the feature dim (inner "arbitrary" axis) so the batch tile
        # stays >= target_rows even for very large D (v7x: 64 MiB VMEM).
        a = 4 * in_itemsize + 12
        c = 128 * (2 * label_itemsize + 12)
        td = (budget_bytes // target_rows - c) // a
        td = max(128, (td // 128) * 128)
        td = min(td, feat)

    tb = budget_bytes // row_bytes(td)
    tb = min(tb, max_rows)                     # bytes-based cap, up to 4096 rows
    if tb >= batch:
        tb = batch                             # full-extent block (always legal)
    else:
        tb = max(8, (tb // 8) * 8)             # sublane-aligned partial tile

    need = tb * row_bytes(td)
    vmem_limit = int(max(16 * 1024 * 1024,
                         min(need + 8 * 1024 * 1024, 100 * 1024 * 1024)))
    return tb, td, vmem_limit


def contrastive_loss(output1, output2, label, *, tile_b=None, tile_d=None):
    """output1, output2: (B, D); label: (B,) or (B, 1). Returns scalar f32."""
    B, D = output1.shape
    label2d = jnp.reshape(label, (B, 1))       # keep native dtype; cast in kernel

    in_itemsize = jnp.dtype(output1.dtype).itemsize
    lab_itemsize = jnp.dtype(label2d.dtype).itemsize
    tb, td, vmem_limit = _plan_tiles(B, D, in_itemsize, lab_itemsize)
    if tile_b is not None:
        tb = B if tile_b >= B else max(8, (tile_b // 8) * 8)
    if tile_d is not None:
        td = D if (tile_d >= D or D <= 128) else max(
            128, (min(tile_d, D) // 128) * 128)

    nb = pl.cdiv(B, tb)
    nd = pl.cdiv(D, td)

    kernel = functools.partial(_contrastive_kernel, feat=D, tile_d=td,
                               mask_cols=(D % td != 0))

    cost = pl.CostEstimate(
        flops=4 * B * D,
        transcendentals=B,                                   # one sqrt per row
        bytes_accessed=2 * B * D * in_itemsize + B * lab_itemsize + B * 4)

    per_row = pl.pallas_call(
        kernel,
        out_shape=jax.ShapeDtypeStruct((B, 1), jnp.float32),
        grid=(nb, nd),
        in_specs=[
            pl.BlockSpec((tb, td), lambda i, j: (i, j)),
            pl.BlockSpec((tb, td), lambda i, j: (i, j)),
            pl.BlockSpec((tb, 1), lambda i, j: (i, 0)),
        ],
        out_specs=pl.BlockSpec((tb, 1), lambda i, j: (i, 0)),
        scratch_shapes=[pltpu.VMEM((tb, 1), jnp.float32)],
        compiler_params=pltpu.CompilerParams(
            dimension_semantics=("parallel", "arbitrary"),
            vmem_limit_bytes=vmem_limit),
        cost_estimate=cost,
    )(output1, output2, label2d)

    return jnp.mean(per_row)                   # mean over the true batch (f32)


def contrastive_loss_ref(output1, output2, label):
    """Pure-JAX reference mirroring the PyTorch module."""
    label2d = jnp.reshape(label, (output1.shape[0], 1)).astype(jnp.float32)
    diff = (output1.astype(jnp.float32) - output2.astype(jnp.float32)) + EPS
    d = jnp.sqrt(jnp.sum(diff * diff, axis=-1, keepdims=True))
    return jnp.mean((1.0 - label2d) * d ** 2
                    + label2d * jnp.maximum(MARGIN - d, 0.0) ** 2)


if __name__ == "__main__":
    key = jax.random.PRNGKey(0)
    keys = jax.random.split(key, 12)

    # Case 1: small embedding batch, single tile (auto tiling).
    B, D = 8, 32
    o1 = jax.random.normal(keys[0], (B, D), dtype=jnp.float32)
    o2 = jax.random.normal(keys[1], (B, D), dtype=jnp.float32)
    lab = jax.random.bernoulli(keys[2], 0.5, (B,)).astype(jnp.float32)
    loss = contrastive_loss(o1, o2, lab)
    jax.block_until_ready(loss)
    ref = contrastive_loss_ref(o1, o2, lab)
    assert jnp.allclose(loss, ref, rtol=1e-5, atol=1e-5), (loss, ref)

    # Case 2: batch not a multiple of the tile -> partial last batch tile
    # (out-of-bounds rows are never written back; no in-kernel mask needed).
    B2, D2 = 20, 64
    p1 = jax.random.normal(keys[3], (B2, D2), dtype=jnp.float32)
    p2 = jax.random.normal(keys[4], (B2, D2), dtype=jnp.float32)
    lab2 = jax.random.bernoulli(keys[5], 0.5, (B2,)).astype(jnp.float32)
    loss2 = contrastive_loss(p1, p2, lab2, tile_b=8)
    jax.block_until_ready(loss2)
    ref2 = contrastive_loss_ref(p1, p2, lab2)
    assert jnp.allclose(loss2, ref2, rtol=1e-5, atol=1e-5), (loss2, ref2)

    # Case 3: forced feature-dim split (inner "arbitrary" axis) with bf16
    # inputs and an uneven last D tile -> exercises the column mask path.
    B3, D3 = 16, 200
    q1 = jax.random.normal(keys[6], (B3, D3), dtype=jnp.bfloat16)
    q2 = jax.random.normal(keys[7], (B3, D3), dtype=jnp.bfloat16)
    lab3 = jax.random.bernoulli(keys[8], 0.5, (B3,)).astype(jnp.float32)
    loss3 = contrastive_loss(q1, q2, lab3, tile_b=8, tile_d=128)
    jax.block_until_ready(loss3)
    ref3 = contrastive_loss_ref(q1, q2, lab3)
    assert jnp.allclose(loss3, ref3, rtol=1e-4, atol=1e-4), (loss3, ref3)

    print("KERNEL_OK")
</pallas_src>

<mosaic_0001>
module attributes {stable_mosaic.version = 11 : i64} {
  func.func @_contrastive_kernel(%arg0: i32, %arg1: i32, %arg2: memref<8x32xf32, #tpu.memory_space<vmem>>, %arg3: memref<8x32xf32, #tpu.memory_space<vmem>>, %arg4: memref<8x1xf32, #tpu.memory_space<vmem>>, %arg5: memref<8x1xf32, #tpu.memory_space<vmem>>, %arg6: memref<8x1xf32, #tpu.memory_space<vmem>>) attributes {dimension_semantics = [#tpu.dimension_semantics<parallel>, #tpu.dimension_semantics<arbitrary>], iteration_bounds = array<i64: 1, 1>, scalar_prefetch = 0 : i64, scratch_operands = 1 : i64, tpu.core_type = #tpu.core_type<tc>, window_params = [{transform_indices = @transform_0, window_bounds = array<i64: 8, 32>}, {transform_indices = @transform_1, window_bounds = array<i64: 8, 32>}, {transform_indices = @transform_2, window_bounds = array<i64: 8, 1>}, {transform_indices = @transform_3, window_bounds = array<i64: 8, 1>}]} {
    %c0_i32 = arith.constant 0 : i32
    %0 = arith.cmpi eq, %arg1, %c0_i32 : i32
    %1 = arith.extui %0 : i1 to i32
    %c0_i32_0 = arith.constant 0 : i32
    %2 = arith.cmpi ne, %1, %c0_i32_0 : i32
    scf.if %2 {
      %cst_11 = arith.constant 0.000000e+00 : f32
      %17 = vector.broadcast %cst_11 : f32 to vector<8x1xf32>
      %c0_12 = arith.constant 0 : index
      %c0_13 = arith.constant 0 : index
      %18 = vector.load %arg6[%c0_12, %c0_13] : memref<8x1xf32, #tpu.memory_space<vmem>>, vector<8x1xf32>
      tpu.vector_store %arg6[%c0_12, %c0_13], %17 {strides = array<i32>} : memref<8x1xf32, #tpu.memory_space<vmem>>, vector<8x1xf32>,
    } else {
    }
    %c0 = arith.constant 0 : index
    %c0_1 = arith.constant 0 : index
    %3 = vector.load %arg2[%c0, %c0_1] : memref<8x32xf32, #tpu.memory_space<vmem>>, vector<8x32xf32>
    %c0_2 = arith.constant 0 : index
    %c0_3 = arith.constant 0 : index
    %4 = vector.load %arg3[%c0_2, %c0_3] : memref<8x32xf32, #tpu.memory_space<vmem>>, vector<8x32xf32>
    %5 = arith.subf %3, %4 : vector<8x32xf32>
    %cst = arith.constant 9.99999997E-7 : f32
    %6 = vector.broadcast %cst : f32 to vector<8x32xf32>
    %7 = arith.addf %5, %6 : vector<8x32xf32>
    %c0_4 = arith.constant 0 : index
    %c0_5 = arith.constant 0 : index
    %8 = vector.load %arg6[%c0_4, %c0_5] : memref<8x1xf32, #tpu.memory_space<vmem>>, vector<8x1xf32>
    %9 = arith.mulf %7, %7 : vector<8x32xf32>
    %cst_6 = arith.constant dense<0.000000e+00> : vector<8xf32>
    %10 = vector.multi_reduction <add>, %9, %cst_6 [1] : vector<8x32xf32> to vector<8xf32>
    %11 = vector.shape_cast %10 : vector<8xf32> to vector<8x1xf32>
    %12 = arith.addf %8, %11 : vector<8x1xf32>
    %c0_7 = arith.constant 0 : index
    %c0_8 = arith.constant 0 : index
    %13 = vector.load %arg6[%c0_7, %c0_8] : memref<8x1xf32, #tpu.memory_space<vmem>>, vector<8x1xf32>
    tpu.vector_store %arg6[%c0_7, %c0_8], %12 {strides = array<i32>} : memref<8x1xf32, #tpu.memory_space<vmem>>, vector<8x1xf32>,
    %c0_i32_9 = arith.constant 0 : i32
    %14 = arith.cmpi eq, %arg1, %c0_i32_9 : i32
    %15 = arith.extui %14 : i1 to i32
    %c0_i32_10 = arith.constant 0 : i32
    %16 = arith.cmpi ne, %15, %c0_i32_10 : i32
    scf.if %16 {
      %c0_11 = arith.constant 0 : index
      %c0_12 = arith.constant 0 : index
      %17 = vector.load %arg4[%c0_11, %c0_12] : memref<8x1xf32, #tpu.memory_space<vmem>>, vector<8x1xf32>
      %c0_13 = arith.constant 0 : index
      %c0_14 = arith.constant 0 : index
      %18 = vector.load %arg6[%c0_13, %c0_14] : memref<8x1xf32, #tpu.memory_space<vmem>>, vector<8x1xf32>
      %19 = math.sqrt %18 : vector<8x1xf32>
      %20 = arith.mulf %19, %19 : vector<8x1xf32>
      %cst_15 = arith.constant 2.000000e+00 : f32
      %21 = vector.broadcast %cst_15 : f32 to vector<8x1xf32>
      %22 = arith.subf %21, %19 : vector<8x1xf32>
      %cst_16 = arith.constant 0.000000e+00 : f32
      %23 = vector.broadcast %cst_16 : f32 to vector<8x1xf32>
      %24 = arith.maximumf %22, %23 : vector<8x1xf32>
      %cst_17 = arith.constant 1.000000e+00 : f32
      %25 = vector.broadcast %cst_17 : f32 to vector<8x1xf32>
      %26 = arith.subf %25, %17 : vector<8x1xf32>
      %27 = arith.mulf %26, %20 : vector<8x1xf32>
      %28 = arith.mulf %24, %24 : vector<8x1xf32>
      %29 = arith.mulf %17, %28 : vector<8x1xf32>
      %30 = arith.addf %27, %29 : vector<8x1xf32>
      %c0_18 = arith.constant 0 : index
      %c0_19 = arith.constant 0 : index
      %31 = vector.load %arg5[%c0_18, %c0_19] : memref<8x1xf32, #tpu.memory_space<vmem>>, vector<8x1xf32>
      tpu.vector_store %arg5[%c0_18, %c0_19], %30 {strides = array<i32>} : memref<8x1xf32, #tpu.memory_space<vmem>>, vector<8x1xf32>,
    } else {
    }
    return
  }
  func.func @transform_0(%arg0: i32, %arg1: i32) -> (i32, i32) {
    %c0_i32 = arith.constant 0 : i32
    return %arg0, %arg1 : i32, i32
  }
  func.func @transform_1(%arg0: i32, %arg1: i32) -> (i32, i32) {
    %c0_i32 = arith.constant 0 : i32
    return %arg0, %arg1 : i32, i32
  }
  func.func @transform_2(%arg0: i32, %arg1: i32) -> (i32, i32) {
    %c0_i32 = arith.constant 0 : i32
    %c0_i32_0 = arith.constant 0 : i32
    return %arg0, %c0_i32 : i32, i32
  }
  func.func @transform_3(%arg0: i32, %arg1: i32) -> (i32, i32) {
    %c0_i32 = arith.constant 0 : i32
    %c0_i32_0 = arith.constant 0 : i32
    return %arg0, %c0_i32 : i32, i32
  }
}

</mosaic_0001>

<llo_original>
// kernel: tpu_custom_call.1
$region0: #{tpu_custom_call.1}
  #allocation0 [shape = 'u32[]', space=smem, size = 0x4, offset = 0x4, fixed_abs, tag = 'smem constant byte address 0x4 - core index']
  #allocation1 [shape = 'u32[144,128]{1,0:T(1,128)}', space=vmem, size = 0x12000, scoped, tag = 'internal scratch']
  #allocation2 [shape = 'f32[8,1]{1,0:T(8,128)}', space=vmem, size = 0x1000, scoped, tag = 'scratch operand']
  %s0 = inlined_call_operand.vmem [shape: f32[8,32], index: 0, kind: input, shape index: {}]
  %s1 = inlined_call_operand.hbm [shape: f32[8,32], index: 1, kind: input, shape index: {}]
  %s2 = inlined_call_operand.vmem [shape: f32[8,1], index: 2, kind: input, shape index: {}]
  %s3 = inlined_call_operand.vmem [shape: f32[8,1], index: 3, kind: output, shape index: {}]
  %s4 = sld [smem:[#allocation0]]
  $region34: #{tpu_custom_call.1} parent=0
    _
  %s6 = ssub.s32 1, %s4
  %s7 = scalar_select 0, %s6, %s4
  $region1: #{tpu_custom_call.1} parent=0
    #allocation3 [shape = 'u8[4096]{0}', space=vmem, size = 0x1000, scoped, tag = 'input window, operand 1, single buffered']
    #allocation4 [shape = 's32[1]{0}', space=sflag, size = 0x4, scoped, tag = 'scoped memory for tpu_custom_call.1']
    %8 = vsyncpa [#allocation4], 0
    // Predicated region
    $region2: #{tpu_custom_call.1} parent=1 // pred_check
      _
    $region3: #{tpu_custom_call.1} parent=1 // pred_check_branch
      %10 = sbr.rel (0) target = $region5
    $region4: #{tpu_custom_call.1} parent=1 // pred_region
      _
    $region5: #{tpu_custom_call.1} parent=1 // pred_fallthru
      _
    // Predicated region
    $region6: #{tpu_custom_call.1} parent=1 // pred_check
      _
    $region7: #{tpu_custom_call.1} parent=1 // pred_check_branch
      %12 = sbr.rel (0) target = $region9
    $region8: #{tpu_custom_call.1} parent=1 // pred_region
      %s14 = ssub.s32 128, 128
      %15 = vsyncadd [#allocation4], %s14
      %s17 = sshll.u32 [#allocation3], 4
      %s18 = int_to_ptr.vmem [resolvable:$true] %s17
      %20 = dma.hbm_to_vmem [thread:$0]  %s1, 128, %s18, [#allocation4]
    $region9: #{tpu_custom_call.1} parent=1 // pred_fallthru
      _
    // Predicated region
    $region10: #{tpu_custom_call.1} parent=1 // pred_check
      _
    $region11: #{tpu_custom_call.1} parent=1 // pred_check_branch
      %22 = sbr.rel (0) target = $region13
    $region12: #{tpu_custom_call.1} parent=1 // pred_region
      _
    $region13: #{tpu_custom_call.1} parent=1 // pred_fallthru
      _
    // Predicated region
    $region14: #{tpu_custom_call.1} parent=1 // pred_check
      _
    $region15: #{tpu_custom_call.1} parent=1 // pred_check_branch
      %24 = sbr.rel (0) target = $region17
    $region16: #{tpu_custom_call.1} parent=1 // pred_region
      %25 = dma.done [#allocation4], 128
    $region17: #{tpu_custom_call.1} parent=1 // pred_fallthru
      _
    %p26 = scmp.eq.s32.totalorder 0, 0
    // Predicated region
    $region18: #{tpu_custom_call.1} parent=1 // pred_check
      %p27 = pneg %p26
    $region19: #{tpu_custom_call.1} parent=1 // pred_check_branch
      %29 = sbr.rel (%p27) target = $region21
    $region20: #{tpu_custom_call.1} parent=1 // pred_region
      %vm30 = vcmask 7168
      %31 = vst.msk [vmem:[#allocation2] sm:$0xff] %vm30, 0.0
    $region21: #{tpu_custom_call.1} parent=1 // pred_fallthru
      _
    %v32 = vld [vmem:[%s0] sm:$0xff]
    %v33 = vld [vmem:[#allocation3] sm:$0xff]
    %v34 = vsub.f32 %v32, %v33
    %v35 = vadd.f32 %v34, 1e-06
    %v36 = vld [vmem:[#allocation2] sm:$0xff]
    %v37 = vmul.f32 %v35, %v35
    %vm38 = vcmask 261120
    %v39 = vsel %vm38, %v37, 0.0
    %40 = vadd.xlane.f32.xlu0 %v39
    %v41 = vpop.xlane.xlu0 %40
    %v42 = vadd.f32 %v36, %v41
    %vm43 = vcmask 7168
    %44 = vst.msk [vmem:[#allocation2] sm:$0xff] %vm43, %v42
    // Predicated region
    $region22: #{tpu_custom_call.1} parent=1 // pred_check
      %p45 = pneg %p26
    $region23: #{tpu_custom_call.1} parent=1 // pred_check_branch
      %47 = sbr.rel (%p45) target = $region25
    $region24: #{tpu_custom_call.1} parent=1 // pred_region
      %v48 = vld [vmem:[%s2] sm:$0xff]
      %v49 = vld [vmem:[#allocation2] sm:$0xff]
      %v50 = vrsqrt.pop %v49
      %v51 = vmul.f32 %v49, %v50
      %vm52 = vcmp.eq.f32.partialorder %v49, inf
      %v53 = vsel %vm52, %v49, %v51
      %vm54 = vcmp.eq.f32.partialorder %v49, 0.0
      %v55 = vand.u32 %v49, 2147483648
      %v56 = vsel %vm54, %v55, %v53
      %v57 = vmul.f32 %v56, %v56
      %v58 = vsub.f32 2.0, %v56
      %v59 = vmax.f32 %v58, 0.0
      %v60 = vsub.f32 1.0, %v48
      %v61 = vmul.f32 %v60, %v57
      %v62 = vmul.f32 %v59, %v59
      %v63 = vmul.f32 %v48, %v62
      %v64 = vadd.f32 %v61, %v63
      %65 = vst.msk [vmem:[%s3] sm:$0xff] %vm43, %v64
    $region25: #{tpu_custom_call.1} parent=1 // pred_fallthru
      _
    // Predicated region
    $region26: #{tpu_custom_call.1} parent=1 // pred_check
      _
    $region27: #{tpu_custom_call.1} parent=1 // pred_check_branch
      %67 = sbr.rel (0) target = $region29
    $region28: #{tpu_custom_call.1} parent=1 // pred_region
      _
    $region29: #{tpu_custom_call.1} parent=1 // pred_fallthru
      _
    // Predicated region
    $region30: #{tpu_custom_call.1} parent=1 // pred_check
      _
    $region31: #{tpu_custom_call.1} parent=1 // pred_check_branch
      %69 = sbr.rel (0) target = $region33
    $region32: #{tpu_custom_call.1} parent=1 // pred_region
      _
    $region33: #{tpu_custom_call.1} parent=1 // pred_fallthru
      _
    %70 = vsyncpa [#allocation4], 1

</llo_original>
